<compile_context>
chip_gen: v5e
topology: v5e:2x2
jax: 0.10.0
libtpu: 0.0.40
codegen_flags: <defaults>
</compile_context>

<pallas_src>
import functools
import math

import jax
import jax.numpy as jnp
from jax.experimental import pallas as pl
from jax.experimental.pallas import tpu as pltpu


def make_deltas(dim, fast_decay_pct=0.3, slow_decay_pct=1.5, target=1e-2,
                dtype=jnp.float32):
    """Matches the registered buffer in the PyTorch module: (1, 1, dim)."""
    max_decay = math.log(target) / fast_decay_pct
    min_decay = math.log(target) / slow_decay_pct
    return jnp.linspace(min_decay, max_decay, dim, dtype=dtype)[None, None]


def _exp_mod_kernel(t_ref, x_ref, deltas_ref, o_ref, *, shift):
    # t_ref:      (tm, 1)   per-row time value
    # x_ref:      (tm, D)   filter values
    # deltas_ref: (1,  D)   per-channel decay rates (resident across the grid)
    # o_ref:      (tm, D)
    t = t_ref[...].astype(jnp.float32)                 # (tm, 1)
    deltas = deltas_ref[...].astype(jnp.float32)       # (1, D)
    decay = jnp.exp(-t * jnp.abs(deltas)) + shift      # (tm, D), exp -> EUP
    o_ref[...] = (x_ref[...].astype(jnp.float32) * decay).astype(o_ref.dtype)


def _pick_row_tile(M, max_tile=512):
    """Largest row tile <= max_tile that is a multiple of 8 and divides M.
    If the whole row axis fits in one block, just take it (full-extent blocks
    are always legal)."""
    if M <= max_tile:
        return M
    for tm in range(max_tile - (max_tile % 8), 0, -8):
        if M % tm == 0:
            return tm
    return M  # fallback: single block


@functools.partial(jax.jit, static_argnames=("shift", "modulate", "max_tile"))
def exponential_modulation(t, x, deltas, *, shift=0.05, modulate=True,
                           max_tile=512):
    """t: (1|B, L, 1), x: (B, L, D), deltas: (1, 1, D)."""
    if not modulate:
        return x

    B, L, D = x.shape
    M = B * L

    x2d = x.reshape(M, D)
    t2d = jnp.broadcast_to(t, (B, L, 1)).reshape(M, 1).astype(jnp.float32)
    deltas2d = deltas.reshape(1, D)

    tm = _pick_row_tile(M, max_tile)
    grid = (M // tm,)

    # For production Hyena shapes D is >= 128 so output stores are lane-dense;
    # for tiny demo dims the full-extent last dim keeps the kernel legal.
    itemsize = jnp.dtype(x.dtype).itemsize
    cost = pl.CostEstimate(
        flops=3 * M * D,
        transcendentals=M * D,
        bytes_accessed=(2 * M * D) * itemsize + (M + D) * 4,
    )

    y2d = pl.pallas_call(
        functools.partial(_exp_mod_kernel, shift=shift),
        out_shape=jax.ShapeDtypeStruct((M, D), x.dtype),
        grid_spec=pltpu.PrefetchScalarGridSpec(
            num_scalar_prefetch=0,
            grid=grid,
            in_specs=[
                pl.BlockSpec((tm, 1), lambda i: (i, 0)),   # t rows (tiled)
                pl.BlockSpec((tm, D), lambda i: (i, 0)),   # x rows (tiled)
                pl.BlockSpec((1, D), lambda i: (0, 0)),    # deltas (resident)
            ],
            out_specs=pl.BlockSpec((tm, D), lambda i: (i, 0)),
        ),
        compiler_params=pltpu.CompilerParams(
            dimension_semantics=("parallel",)),  # megacore-shardable on v7x
        cost_estimate=cost,
    )(t2d, x2d, deltas2d)

    return y2d.reshape(B, L, D)


if __name__ == "__main__":
    # Small shapes consistent with the module: batch=2, seq=8, dim=32.
    B, L, dim = 2, 8, 32
    shift = 0.05
    fast_decay_pct, slow_decay_pct, target = 0.3, 1.5, 0.01

    key = jax.random.PRNGKey(0)
    x = jax.random.normal(key, (B, L, dim), jnp.float32)
    # Hyena passes t = linspace(0, 1, L)[None, :, None]
    t = jnp.linspace(0.0, 1.0, L, dtype=jnp.float32)[None, :, None]
    deltas = make_deltas(dim, fast_decay_pct, slow_decay_pct, target)

    y = exponential_modulation(t, x, deltas, shift=shift, modulate=True)
    y = jax.block_until_ready(y)

    # Plain-JAX reference (mirrors the PyTorch forward exactly).
    decay_ref = jnp.exp(-t * jnp.abs(deltas))
    ref = x * (decay_ref + shift)
    assert jnp.allclose(y, ref, atol=1e-6, rtol=1e-6), "mismatch vs reference"

    # modulate=False path must be identity.
    y_id = exponential_modulation(t, x, deltas, shift=shift, modulate=False)
    assert jnp.allclose(jax.block_until_ready(y_id), x)

    print("KERNEL_OK")
</pallas_src>

<mosaic_0001>
module attributes {stable_mosaic.version = 11 : i64} {
  func.func @_exp_mod_kernel(%arg0: i32, %arg1: memref<16x1xf32, #tpu.memory_space<vmem>>, %arg2: memref<16x32xf32, #tpu.memory_space<vmem>>, %arg3: memref<1x32xf32, #tpu.memory_space<vmem>>, %arg4: memref<16x32xf32, #tpu.memory_space<vmem>>) attributes {dimension_semantics = [#tpu.dimension_semantics<parallel>], iteration_bounds = array<i64: 1>, scalar_prefetch = 0 : i64, scratch_operands = 0 : i64, tpu.core_type = #tpu.core_type<tc>, window_params = [{transform_indices = @transform_0, window_bounds = array<i64: 16, 1>}, {transform_indices = @transform_1, window_bounds = array<i64: 16, 32>}, {pipeline_mode = #tpu.pipeline_mode<synchronous>, transform_indices = @transform_2, window_bounds = array<i64: 1, 32>}, {transform_indices = @transform_3, window_bounds = array<i64: 16, 32>}]} {
    %c0 = arith.constant 0 : index
    %c0_0 = arith.constant 0 : index
    %0 = vector.load %arg1[%c0, %c0_0] : memref<16x1xf32, #tpu.memory_space<vmem>>, vector<16x1xf32>
    %c0_1 = arith.constant 0 : index
    %c0_2 = arith.constant 0 : index
    %1 = vector.load %arg3[%c0_1, %c0_2] : memref<1x32xf32, #tpu.memory_space<vmem>>, vector<1x32xf32>
    %cst = arith.constant 0.000000e+00 : f32
    %2 = vector.broadcast %cst : f32 to vector<16x1xf32>
    %3 = arith.subf %2, %0 : vector<16x1xf32>
    %4 = math.absf %1 : vector<1x32xf32>
    %5 = vector.broadcast %3 : vector<16x1xf32> to vector<16x32xf32>
    %6 = vector.broadcast %4 : vector<1x32xf32> to vector<16x32xf32>
    %7 = arith.mulf %5, %6 : vector<16x32xf32>
    %8 = math.exp %7 : vector<16x32xf32>
    %cst_3 = arith.constant 5.000000e-02 : f32
    %9 = vector.broadcast %cst_3 : f32 to vector<16x32xf32>
    %10 = arith.addf %8, %9 : vector<16x32xf32>
    %c0_4 = arith.constant 0 : index
    %c0_5 = arith.constant 0 : index
    %11 = vector.load %arg2[%c0_4, %c0_5] : memref<16x32xf32, #tpu.memory_space<vmem>>, vector<16x32xf32>
    %12 = arith.mulf %11, %10 : vector<16x32xf32>
    %c0_6 = arith.constant 0 : index
    %c0_7 = arith.constant 0 : index
    %13 = vector.load %arg4[%c0_6, %c0_7] : memref<16x32xf32, #tpu.memory_space<vmem>>, vector<16x32xf32>
    tpu.vector_store %arg4[%c0_6, %c0_7], %12 {strides = array<i32>} : memref<16x32xf32, #tpu.memory_space<vmem>>, vector<16x32xf32>,
    return
  }
  func.func @transform_0(%arg0: i32) -> (i32, i32) {
    %c0_i32 = arith.constant 0 : i32
    %c0_i32_0 = arith.constant 0 : i32
    return %arg0, %c0_i32 : i32, i32
  }
  func.func @transform_1(%arg0: i32) -> (i32, i32) {
    %c0_i32 = arith.constant 0 : i32
    %c0_i32_0 = arith.constant 0 : i32
    return %arg0, %c0_i32 : i32, i32
  }
  func.func @transform_2(%arg0: i32) -> (i32, i32) {
    %c0_i32 = arith.constant 0 : i32
    %c0_i32_0 = arith.constant 0 : i32
    %c0_i32_1 = arith.constant 0 : i32
    return %c0_i32, %c0_i32_0 : i32, i32
  }
  func.func @transform_3(%arg0: i32) -> (i32, i32) {
    %c0_i32 = arith.constant 0 : i32
    %c0_i32_0 = arith.constant 0 : i32
    return %arg0, %c0_i32 : i32, i32
  }
}

</mosaic_0001>

<llo_original>
// kernel: exponential_modulation.1
$region0: #{exponential_modulation.1}
  #allocation0 [shape = 'u32[]', space=smem, size = 0x4, offset = 0x4, fixed_abs, tag = 'smem constant byte address 0x4 - core index']
  #allocation1 [shape = 'u32[72,128]{1,0:T(1,128)}', space=vmem, size = 0x9000, scoped, tag = 'internal scratch']
  %s0 = inlined_call_operand.vmem [shape: f32[16,1], index: 0, kind: input, shape index: {}]
  %s1 = inlined_call_operand.vmem [shape: f32[16,32], index: 1, kind: input, shape index: {}]
  %s2 = inlined_call_operand.vmem [shape: f32[1,32], index: 2, kind: input, shape index: {}]
  %s3 = inlined_call_operand.hbm [shape: f32[16,32], index: 3, kind: output, shape index: {}]
  %s4 = sld [smem:[#allocation0]]
  $region22: #{exponential_modulation.1} parent=0
    _
  %s6 = ssub.s32 1, %s4
  %s7 = scalar_select 0, %s6, %s4
  $region1: #{exponential_modulation.1} parent=0
    #allocation2 [shape = 'u8[8192]{0}', space=vmem, size = 0x2000, scoped, tag = 'output window, operand 0, single buffered']
    #allocation3 [shape = 's32[1]{0}', space=sflag, size = 0x4, scoped, tag = 'scoped memory for exponential_modulation.1']
    %8 = vsyncpa [#allocation3], 0
    // Predicated region
    $region2: #{exponential_modulation.1} parent=1 // pred_check
      _
    $region3: #{exponential_modulation.1} parent=1 // pred_check_branch
      %10 = sbr.rel (0) target = $region5
    $region4: #{exponential_modulation.1} parent=1 // pred_region
      _
    $region5: #{exponential_modulation.1} parent=1 // pred_fallthru
      _
    // Predicated region
    $region6: #{exponential_modulation.1} parent=1 // pred_check
      _
    $region7: #{exponential_modulation.1} parent=1 // pred_check_branch
      %12 = sbr.rel (0) target = $region9
    $region8: #{exponential_modulation.1} parent=1 // pred_region
      _
    $region9: #{exponential_modulation.1} parent=1 // pred_fallthru
      _
    // Predicated region
    $region10: #{exponential_modulation.1} parent=1 // pred_check
      _
    $region11: #{exponential_modulation.1} parent=1 // pred_check_branch
      %14 = sbr.rel (0) target = $region13
    $region12: #{exponential_modulation.1} parent=1 // pred_region
      _
    $region13: #{exponential_modulation.1} parent=1 // pred_fallthru
      _
    %v15 = vld [vmem:[%s0] sm:$0xff]
    %v16 = vld [vmem:[%s0 + $0x8] sm:$0xff]
    %v17 = vld [vmem:[%s2] sm:$0x1]
    %v18 = vsub.f32 0.0, %v15
    %v19 = vsub.f32 0.0, %v16
    %v20 = vand.u32 2147483647, %v17
    %22 = vset.pattern.permute.xlu0 0
    %23 = vperm.xlu0 %22, %v18
    %v24 = vpop.permute.xlu0 %23
    %27 = vset.pattern.permute.xlu0 0
    %28 = vperm.xlu0 %27, %v19
    %v29 = vpop.permute.xlu0 %28
    %v32 = vperm.slane %v20, 0
    %v34 = vmul.f32 %v24, %v32
    %v35 = vmul.f32 %v29, %v32
    %v36 = vmul.f32 %v34, 1.442695
    %v37 = vpow.pop %v36
    %v38 = vmul.f32 %v35, 1.442695
    %v39 = vpow.pop %v38
    %v40 = vadd.f32 %v37, 0.05
    %v41 = vadd.f32 %v39, 0.05
    %v42 = vld [vmem:[%s1] sm:$0xff]
    %v43 = vld [vmem:[%s1 + $0x8] sm:$0xff]
    %v44 = vmul.f32 %v42, %v40
    %v45 = vmul.f32 %v43, %v41
    %vm46 = vcmask 261120
    %47 = vst.msk [vmem:[#allocation2] sm:$0xff] %vm46, %v44
    %48 = vst.msk [vmem:[#allocation2 + $0x8] sm:$0xff] %vm46, %v45
    // Predicated region
    $region14: #{exponential_modulation.1} parent=1 // pred_check
      _
    $region15: #{exponential_modulation.1} parent=1 // pred_check_branch
      %50 = sbr.rel (0) target = $region17
    $region16: #{exponential_modulation.1} parent=1 // pred_region
      %52 = vsyncadd [#allocation3], 0
      %s53 = sshll.u32 [#allocation2], 4
      %s54 = int_to_ptr.vmem [resolvable:$true] %s53
      %s55 = sshll.u32 %s3, 4
      %s56 = int_to_ptr.hbm [resolvable:$true] %s55
      %61 = dma.vmem_to_hbm [thread:$0]  %s54, 256, %s56, [#allocation3], 128, 128, 8
    $region17: #{exponential_modulation.1} parent=1 // pred_fallthru
      _
    // Predicated region
    $region18: #{exponential_modulation.1} parent=1 // pred_check
      _
    $region19: #{exponential_modulation.1} parent=1 // pred_check_branch
      %63 = sbr.rel (0) target = $region21
    $region20: #{exponential_modulation.1} parent=1 // pred_region
      %65 = dma.done [#allocation3], 256
    $region21: #{exponential_modulation.1} parent=1 // pred_fallthru
      _
    %66 = vsyncpa [#allocation3], 1

</llo_original>
